<compile_context>
chip_gen: v7x
topology: tpu7x:2x2x1
jax: 0.10.0
libtpu: 0.0.40
codegen_flags: <defaults>
</compile_context>

<pallas_src>
import functools

import jax
import jax.numpy as jnp
from jax.experimental import pallas as pl
from jax.experimental.pallas import tpu as pltpu


def _softmax_lastdim(x):
    # Numerically stable softmax along the lane (last) axis.
    m = jnp.max(x, axis=-1, keepdims=True)
    e = jnp.exp(x - m)
    return e / jnp.sum(e, axis=-1, keepdims=True)


def attentive_pooling_kernel(
    first_ref,    # VMEM (Lt, C)
    second_ref,   # VMEM (Lt, P)
    param_ref,    # VMEM (C, P)   resident across grid
    param_t_ref,  # VMEM (P, C)   resident across grid
    rep1_ref,     # VMEM (Lt, C)
    attn1_ref,    # VMEM (Lt, C)
    rep2_ref,     # VMEM (Lt, P)
    attn2_ref,    # VMEM (Lt, P)
):
    f = first_ref[...].astype(jnp.float32)    # (Lt, C)
    s = second_ref[...].astype(jnp.float32)   # (Lt, P)
    w = param_ref[...].astype(jnp.float32)    # (C, P)
    wt = param_t_ref[...].astype(jnp.float32)  # (P, C)

    # wm1 = tanh(second @ param.T) -> (Lt, C); wm2 = tanh(first @ param) -> (Lt, P)
    wm1 = jnp.tanh(jnp.dot(s, wt, preferred_element_type=jnp.float32))
    wm2 = jnp.tanh(jnp.dot(f, w, preferred_element_type=jnp.float32))

    a1 = _softmax_lastdim(wm1)
    a2 = _softmax_lastdim(wm2)

    attn1_ref[...] = a1.astype(attn1_ref.dtype)
    attn2_ref[...] = a2.astype(attn2_ref.dtype)
    rep1_ref[...] = (f * a1).astype(rep1_ref.dtype)
    rep2_ref[...] = (s * a2).astype(rep2_ref.dtype)


@functools.partial(jax.jit, static_argnames=("l_tile",))
def attentive_pooling(first, second, param, *, l_tile=None):
    """first: (B, L, C), second: (B, L, P), param: (C, P)."""
    B, L, C = first.shape
    B2, L2, P = second.shape
    assert B == B2 and L == L2, (first.shape, second.shape)
    assert param.shape == (C, P), param.shape

    if l_tile is None:
        # Full sequence if small, else 128-row tiles (lane/sublane friendly).
        l_tile = L if L <= 128 else 128
    assert L % l_tile == 0, (L, l_tile)
    n_l = L // l_tile

    param_t = param.T  # one-time transpose in XLA, outside the kernel

    grid = (B, n_l)

    in_specs = [
        pl.BlockSpec((None, l_tile, C), lambda b, l: (b, l, 0)),   # first
        pl.BlockSpec((None, l_tile, P), lambda b, l: (b, l, 0)),   # second
        pl.BlockSpec((C, P), lambda b, l: (0, 0)),                 # param (resident)
        pl.BlockSpec((P, C), lambda b, l: (0, 0)),                 # param.T (resident)
    ]
    out_specs = (
        pl.BlockSpec((None, l_tile, C), lambda b, l: (b, l, 0)),   # rep_first
        pl.BlockSpec((None, l_tile, C), lambda b, l: (b, l, 0)),   # score_m1
        pl.BlockSpec((None, l_tile, P), lambda b, l: (b, l, 0)),   # rep_second
        pl.BlockSpec((None, l_tile, P), lambda b, l: (b, l, 0)),   # score_m2
    )
    out_shape = (
        jax.ShapeDtypeStruct((B, L, C), first.dtype),
        jax.ShapeDtypeStruct((B, L, C), first.dtype),
        jax.ShapeDtypeStruct((B, L, P), second.dtype),
        jax.ShapeDtypeStruct((B, L, P), second.dtype),
    )

    return pl.pallas_call(
        attentive_pooling_kernel,
        grid=grid,
        in_specs=in_specs,
        out_specs=out_specs,
        out_shape=out_shape,
        compiler_params=pltpu.CompilerParams(
            dimension_semantics=("parallel", "parallel")),
    )(first, second, param, param_t)


def attentive_pooling_ref(first, second, param):
    """Pure-JAX reference (mirrors the PyTorch forward)."""
    hi = jax.lax.Precision.HIGHEST
    wm1 = jnp.tanh(jnp.einsum("blp,cp->blc", second, param, precision=hi))
    wm2 = jnp.tanh(jnp.einsum("blc,cp->blp", first, param, precision=hi))
    a1 = jax.nn.softmax(wm1, axis=-1)
    a2 = jax.nn.softmax(wm2, axis=-1)
    return first * a1, a1, second * a2, a2


if __name__ == "__main__":
    # Small shapes consistent with the module defaults (chem=128, prot=256).
    B, L, C, P = 2, 8, 128, 256

    key = jax.random.PRNGKey(0)
    k1, k2, k3 = jax.random.split(key, 3)
    first = jax.random.normal(k1, (B, L, C), jnp.float32)
    second = jax.random.normal(k2, (B, L, P), jnp.float32)
    # Module initializes param to zeros; use small random values so the test is
    # numerically meaningful (zeros would make every softmax exactly uniform).
    param = 0.1 * jax.random.normal(k3, (C, P), jnp.float32)

    rep1, attn1, rep2, attn2 = jax.block_until_ready(
        attentive_pooling(first, second, param))

    assert rep1.shape == (B, L, C) and attn1.shape == (B, L, C)
    assert rep2.shape == (B, L, P) and attn2.shape == (B, L, P)
    for t in (rep1, attn1, rep2, attn2):
        assert bool(jnp.all(jnp.isfinite(t)))

    # Attention scores are softmaxes: rows sum to 1.
    assert bool(jnp.allclose(jnp.sum(attn1, axis=-1), 1.0, atol=1e-3))
    assert bool(jnp.allclose(jnp.sum(attn2, axis=-1), 1.0, atol=1e-3))

    # Compare against the pure-JAX reference.
    r1, a1, r2, a2 = attentive_pooling_ref(first, second, param)
    assert bool(jnp.allclose(rep1, r1, atol=2e-3, rtol=2e-3))
    assert bool(jnp.allclose(attn1, a1, atol=2e-3, rtol=2e-3))
    assert bool(jnp.allclose(rep2, r2, atol=2e-3, rtol=2e-3))
    assert bool(jnp.allclose(attn2, a2, atol=2e-3, rtol=2e-3))

    print("KERNEL_OK")
</pallas_src>

<mosaic_0001>
module attributes {stable_mosaic.version = 11 : i64} {
  func.func @attentive_pooling_kernel(%arg0: i32, %arg1: i32, %arg2: memref<1x8x128xf32, #tpu.memory_space<vmem>>, %arg3: memref<1x8x256xf32, #tpu.memory_space<vmem>>, %arg4: memref<128x256xf32, #tpu.memory_space<vmem>>, %arg5: memref<256x128xf32, #tpu.memory_space<vmem>>, %arg6: memref<1x8x128xf32, #tpu.memory_space<vmem>>, %arg7: memref<1x8x128xf32, #tpu.memory_space<vmem>>, %arg8: memref<1x8x256xf32, #tpu.memory_space<vmem>>, %arg9: memref<1x8x256xf32, #tpu.memory_space<vmem>>) attributes {dimension_semantics = [#tpu.dimension_semantics<parallel>, #tpu.dimension_semantics<parallel>], iteration_bounds = array<i64: 2, 1>, scalar_prefetch = 0 : i64, scratch_operands = 0 : i64, tpu.core_type = #tpu.core_type<tc>, window_params = [{transform_indices = @transform_0, window_bounds = array<i64: 1, 8, 128>}, {transform_indices = @transform_1, window_bounds = array<i64: 1, 8, 256>}, {pipeline_mode = #tpu.pipeline_mode<synchronous>, transform_indices = @transform_2, window_bounds = array<i64: 128, 256>}, {pipeline_mode = #tpu.pipeline_mode<synchronous>, transform_indices = @transform_3, window_bounds = array<i64: 256, 128>}, {transform_indices = @transform_4, window_bounds = array<i64: 1, 8, 128>}, {transform_indices = @transform_5, window_bounds = array<i64: 1, 8, 128>}, {transform_indices = @transform_6, window_bounds = array<i64: 1, 8, 256>}, {transform_indices = @transform_7, window_bounds = array<i64: 1, 8, 256>}]} {
    %c0 = arith.constant 0 : index
    %c0_0 = arith.constant 0 : index
    %c0_1 = arith.constant 0 : index
    %0 = vector.load %arg2[%c0, %c0_0, %c0_1] : memref<1x8x128xf32, #tpu.memory_space<vmem>>, vector<1x8x128xf32>
    %1 = vector.shape_cast %0 : vector<1x8x128xf32> to vector<8x128xf32>
    %c0_2 = arith.constant 0 : index
    %c0_3 = arith.constant 0 : index
    %c0_4 = arith.constant 0 : index
    %2 = vector.load %arg3[%c0_2, %c0_3, %c0_4] : memref<1x8x256xf32, #tpu.memory_space<vmem>>, vector<1x8x256xf32>
    %3 = vector.shape_cast %2 : vector<1x8x256xf32> to vector<8x256xf32>
    %c0_5 = arith.constant 0 : index
    %c0_6 = arith.constant 0 : index
    %4 = vector.load %arg4[%c0_5, %c0_6] : memref<128x256xf32, #tpu.memory_space<vmem>>, vector<128x256xf32>
    %c0_7 = arith.constant 0 : index
    %c0_8 = arith.constant 0 : index
    %5 = vector.load %arg5[%c0_7, %c0_8] : memref<256x128xf32, #tpu.memory_space<vmem>>, vector<256x128xf32>
    %cst = arith.constant dense<0.000000e+00> : vector<8x128xf32>
    %6 = tpu.matmul %3, %5, %cst {dimension_numbers = #tpu.dot_dimension_numbers<[1], [0], [0], [1], [0, 0, 1, 1], [], []>} : vector<8x256xf32>, vector<256x128xf32>, vector<8x128xf32> -> vector<8x128xf32>
    %7 = math.tanh %6 : vector<8x128xf32>
    %cst_9 = arith.constant dense<0.000000e+00> : vector<8x256xf32>
    %8 = tpu.matmul %1, %4, %cst_9 {dimension_numbers = #tpu.dot_dimension_numbers<[1], [0], [0], [1], [0, 0, 1, 1], [], []>} : vector<8x128xf32>, vector<128x256xf32>, vector<8x256xf32> -> vector<8x256xf32>
    %9 = math.tanh %8 : vector<8x256xf32>
    %cst_10 = arith.constant dense<0xFF800000> : vector<8xf32>
    %10 = vector.multi_reduction <maximumf>, %7, %cst_10 [1] : vector<8x128xf32> to vector<8xf32>
    %11 = vector.shape_cast %10 : vector<8xf32> to vector<8x1xf32>
    %12 = vector.broadcast %11 : vector<8x1xf32> to vector<8x128xf32>
    %13 = arith.subf %7, %12 : vector<8x128xf32>
    %14 = math.exp %13 : vector<8x128xf32>
    %cst_11 = arith.constant dense<0.000000e+00> : vector<8xf32>
    %15 = vector.multi_reduction <add>, %14, %cst_11 [1] : vector<8x128xf32> to vector<8xf32>
    %16 = vector.shape_cast %15 : vector<8xf32> to vector<8x1xf32>
    %17 = vector.broadcast %16 : vector<8x1xf32> to vector<8x128xf32>
    %18 = arith.divf %14, %17 : vector<8x128xf32>
    %cst_12 = arith.constant dense<0xFF800000> : vector<8xf32>
    %19 = vector.multi_reduction <maximumf>, %9, %cst_12 [1] : vector<8x256xf32> to vector<8xf32>
    %20 = vector.shape_cast %19 : vector<8xf32> to vector<8x1xf32>
    %21 = vector.broadcast %20 : vector<8x1xf32> to vector<8x256xf32>
    %22 = arith.subf %9, %21 : vector<8x256xf32>
    %23 = math.exp %22 : vector<8x256xf32>
    %cst_13 = arith.constant dense<0.000000e+00> : vector<8xf32>
    %24 = vector.multi_reduction <add>, %23, %cst_13 [1] : vector<8x256xf32> to vector<8xf32>
    %25 = vector.shape_cast %24 : vector<8xf32> to vector<8x1xf32>
    %26 = vector.broadcast %25 : vector<8x1xf32> to vector<8x256xf32>
    %27 = arith.divf %23, %26 : vector<8x256xf32>
    %c0_14 = arith.constant 0 : index
    %c0_15 = arith.constant 0 : index
    %c0_16 = arith.constant 0 : index
    %28 = vector.load %arg7[%c0_14, %c0_15, %c0_16] : memref<1x8x128xf32, #tpu.memory_space<vmem>>, vector<1x8x128xf32>
    %29 = vector.shape_cast %28 : vector<1x8x128xf32> to vector<8x128xf32>
    %30 = vector.shape_cast %18 : vector<8x128xf32> to vector<1x8x128xf32>
    tpu.vector_store %arg7[%c0_14, %c0_15, %c0_16], %30 {strides = array<i32>} : memref<1x8x128xf32, #tpu.memory_space<vmem>>, vector<1x8x128xf32>,
    %c0_17 = arith.constant 0 : index
    %c0_18 = arith.constant 0 : index
    %c0_19 = arith.constant 0 : index
    %31 = vector.load %arg9[%c0_17, %c0_18, %c0_19] : memref<1x8x256xf32, #tpu.memory_space<vmem>>, vector<1x8x256xf32>
    %32 = vector.shape_cast %31 : vector<1x8x256xf32> to vector<8x256xf32>
    %33 = vector.shape_cast %27 : vector<8x256xf32> to vector<1x8x256xf32>
    tpu.vector_store %arg9[%c0_17, %c0_18, %c0_19], %33 {strides = array<i32>} : memref<1x8x256xf32, #tpu.memory_space<vmem>>, vector<1x8x256xf32>,
    %34 = arith.mulf %1, %18 : vector<8x128xf32>
    %c0_20 = arith.constant 0 : index
    %c0_21 = arith.constant 0 : index
    %c0_22 = arith.constant 0 : index
    %35 = vector.load %arg6[%c0_20, %c0_21, %c0_22] : memref<1x8x128xf32, #tpu.memory_space<vmem>>, vector<1x8x128xf32>
    %36 = vector.shape_cast %35 : vector<1x8x128xf32> to vector<8x128xf32>
    %37 = vector.shape_cast %34 : vector<8x128xf32> to vector<1x8x128xf32>
    tpu.vector_store %arg6[%c0_20, %c0_21, %c0_22], %37 {strides = array<i32>} : memref<1x8x128xf32, #tpu.memory_space<vmem>>, vector<1x8x128xf32>,
    %38 = arith.mulf %3, %27 : vector<8x256xf32>
    %c0_23 = arith.constant 0 : index
    %c0_24 = arith.constant 0 : index
    %c0_25 = arith.constant 0 : index
    %39 = vector.load %arg8[%c0_23, %c0_24, %c0_25] : memref<1x8x256xf32, #tpu.memory_space<vmem>>, vector<1x8x256xf32>
    %40 = vector.shape_cast %39 : vector<1x8x256xf32> to vector<8x256xf32>
    %41 = vector.shape_cast %38 : vector<8x256xf32> to vector<1x8x256xf32>
    tpu.vector_store %arg8[%c0_23, %c0_24, %c0_25], %41 {strides = array<i32>} : memref<1x8x256xf32, #tpu.memory_space<vmem>>, vector<1x8x256xf32>,
    return
  }
  func.func @transform_0(%arg0: i32, %arg1: i32) -> (i32, i32, i32) {
    %c0_i32 = arith.constant 0 : i32
    %c0_i32_0 = arith.constant 0 : i32
    return %arg0, %arg1, %c0_i32 : i32, i32, i32
  }
  func.func @transform_1(%arg0: i32, %arg1: i32) -> (i32, i32, i32) {
    %c0_i32 = arith.constant 0 : i32
    %c0_i32_0 = arith.constant 0 : i32
    return %arg0, %arg1, %c0_i32 : i32, i32, i32
  }
  func.func @transform_2(%arg0: i32, %arg1: i32) -> (i32, i32) {
    %c0_i32 = arith.constant 0 : i32
    %c0_i32_0 = arith.constant 0 : i32
    %c0_i32_1 = arith.constant 0 : i32
    return %c0_i32, %c0_i32_0 : i32, i32
  }
  func.func @transform_3(%arg0: i32, %arg1: i32) -> (i32, i32) {
    %c0_i32 = arith.constant 0 : i32
    %c0_i32_0 = arith.constant 0 : i32
    %c0_i32_1 = arith.constant 0 : i32
    return %c0_i32, %c0_i32_0 : i32, i32
  }
  func.func @transform_4(%arg0: i32, %arg1: i32) -> (i32, i32, i32) {
    %c0_i32 = arith.constant 0 : i32
    %c0_i32_0 = arith.constant 0 : i32
    return %arg0, %arg1, %c0_i32 : i32, i32, i32
  }
  func.func @transform_5(%arg0: i32, %arg1: i32) -> (i32, i32, i32) {
    %c0_i32 = arith.constant 0 : i32
    %c0_i32_0 = arith.constant 0 : i32
    return %arg0, %arg1, %c0_i32 : i32, i32, i32
  }
  func.func @transform_6(%arg0: i32, %arg1: i32) -> (i32, i32, i32) {
    %c0_i32 = arith.constant 0 : i32
    %c0_i32_0 = arith.constant 0 : i32
    return %arg0, %arg1, %c0_i32 : i32, i32, i32
  }
  func.func @transform_7(%arg0: i32, %arg1: i32) -> (i32, i32, i32) {
    %c0_i32 = arith.constant 0 : i32
    %c0_i32_0 = arith.constant 0 : i32
    return %arg0, %arg1, %c0_i32 : i32, i32, i32
  }
}

</mosaic_0001>

<llo_original>
// kernel: attentive_pooling.1
$region0: #{attentive_pooling.1}
  #allocation0 [shape = 'u32[]', space=smem, size = 0x4, offset = 0x4, fixed_abs, tag = 'smem constant byte address 0x4 - core index']
  #allocation1 [shape = 'u32[144,128]{1,0:T(1,128)}', space=vmem, size = 0x12000, scoped, tag = 'internal scratch']
  %s0 = inlined_call_operand.vmem [shape: f32[2,8,128], index: 0, kind: input, shape index: {}]
  %s1 = inlined_call_operand.vmem [shape: f32[2,8,256], index: 1, kind: input, shape index: {}]
  %s2 = inlined_call_operand.vmem [shape: f32[128,256], index: 2, kind: input, shape index: {}]
  %s3 = inlined_call_operand.vmem [shape: f32[256,128], index: 3, kind: input, shape index: {}]
  %s4 = inlined_call_operand.hbm [shape: f32[2,8,128], index: 4, kind: output, shape index: {0}]
  %s5 = inlined_call_operand.hbm [shape: f32[2,8,128], index: 5, kind: output, shape index: {1}]
  %s6 = inlined_call_operand.hbm [shape: f32[2,8,256], index: 6, kind: output, shape index: {2}]
  %s7 = inlined_call_operand.hbm [shape: f32[2,8,256], index: 7, kind: output, shape index: {3}]
  %8 = xla_tuple %s4, %s5, %s6, %s7
  %s9 = sld [smem:[#allocation0]]
  $region73: #{attentive_pooling.1} parent=0
    _
  %s11 = ssub.s32 1, %s9
  %s12 = scalar_select 0, %s11, %s9
  $region1: #{attentive_pooling.1} parent=0
    #allocation2 [shape = 'u8[8192]{0}', space=vmem, size = 0x2000, scoped, tag = 'output window, operand 0']
    #allocation3 [shape = 's32[2]{0}', space=sflag, size = 0x8, scoped, tag = 'scoped memory for attentive_pooling.1']
    #allocation4 [shape = 'u8[8192]{0}', space=vmem, size = 0x2000, scoped, tag = 'output window, operand 1']
    #allocation5 [shape = 's32[2]{0}', space=sflag, size = 0x8, scoped, tag = 'scoped memory for attentive_pooling.1']
    #allocation6 [shape = 'u8[16384]{0}', space=vmem, size = 0x4000, scoped, tag = 'output window, operand 2']
    #allocation7 [shape = 'u8[16384]{0}', space=vmem, size = 0x4000, scoped, tag = 'output window, operand 3']
    #allocation8 [shape = 's32[2]{0}', space=sflag, size = 0x8, scoped, tag = 'scoped memory for attentive_pooling.1']
    %13 = vsyncpa [#allocation3], 0
    %s14 = scalar_lea.sflag [#allocation3], 1
    %15 = vsyncpa %s14, 0
    %16 = vsyncpa [#allocation5], 0
    %s17 = scalar_lea.sflag [#allocation5], 1
    %18 = vsyncpa %s17, 0
    %19 = vsyncpa [#allocation8], 0
    %s20 = scalar_lea.sflag [#allocation8], 1
    %21 = vsyncpa %s20, 0
    loop: start=0, step=1, limit=4
    $region2: #{attentive_pooling.1} parent=1 // loop_pre_header
      _
    $region3: #{attentive_pooling.1} parent=1 // loop_header
      %s23 = sphi 0, %s27
      %p24 = scmp.ge.s32.totalorder %s23, 4
      %s30 = sphi 0, %s42
      %s31 = sphi 0, %s38
      %s32 = sphi 0, %s30
      %s33 = sphi 0, %s31
      %s34 = sphi 0, %s32
      %s35 = sphi 0, %s33
      %s47 = sphi 0, %s49
      %s50 = sphi 0, %s47
      %s51 = sphi 0, %s50
      %s67 = sphi 0, %s51
      %s75 = sphi 0, %s77
      %s78 = sphi 0, %s75
      %s79 = sphi 0, %s78
      %s95 = sphi 0, %s79
      %s99 = sphi 0, %s99
      %s101 = sphi 0, %s99
      %s102 = sphi 0, %s101
      %s116 = sphi 0, %s102
      %s120 = sphi 0, %s120
      %s122 = sphi 0, %s120
      %s123 = sphi 0, %s122
      %s137 = sphi 0, %s123
      %s145 = sphi 0, %s147
      %s148 = sphi 0, %s145
      %s149 = sphi 0, %s148
      %s165 = sphi 0, %s149
      %s173 = sphi 0, %s175
      %s176 = sphi 0, %s173
      %s177 = sphi 0, %s176
      %s193 = sphi 0, %s177
      %s201 = sphi 0, %s203
      %s204 = sphi 0, %s201
      %s205 = sphi 0, %s204
      %s221 = sphi 0, %s205
      %s229 = sphi 0, %s231
      %s232 = sphi 0, %s229
      %s233 = sphi 0, %s232
      %s249 = sphi 0, %s233
    $region4: #{attentive_pooling.1} parent=1 // loop_header_branch
      %26 = sbr.rel (%p24) target = $region8
    $region5: #{attentive_pooling.1} parent=1 // loop_body
      %s28 = ssub.s32 %s23, 1
      %s29 = ssub.s32 %s23, 2
      %s36 = sadd.s32 1, %s31
      %p37 = scmp.ge.s32.totalorder %s36, 1
      %s38 = scalar_select %p37, 0, %s36
      %s39 = sadd.s32 1, %s30
      %s40 = scalar_select %p37, %s39, %s30
      %p41 = scmp.ge.s32.totalorder %s40, 2
      %s42 = scalar_select %p41, 0, %s40
      %s43 = ssub.s32 %s30, %s42
      %s44 = ssub.s32 %s31, %s38
      %s45 = sor.u32 %s43, %s44
      %p46 = scmp.eq.s32.totalorder %s45, 0
      %s48 = sadd.s32 %s47, 1
      %s49 = scalar_select %p46, %s47, %s48
      %p52 = pneg %p46
      %p53 = scmp.eq.s32.totalorder %s23, 1
      %p54 = por %p52, %p53
      %p55 = scmp.ne.s32.totalorder %s47, %s50
      %p56 = scmp.eq.s32.totalorder %s23, 0
      %p57 = por %p55, %p56
      %p58 = scmp.ne.s32.totalorder %s47, %s50
      %p59 = scmp.eq.s32.totalorder %s28, 1
      %p60 = por %p58, %p59
      %p61 = scmp.ne.s32.totalorder %s50, %s51
      %p62 = scmp.eq.s32.totalorder %s28, 0
      %p63 = por %p61, %p62
      %p64 = scmp.ne.s32.totalorder %s50, %s51
      %p65 = scmp.eq.s32.totalorder %s29, 1
      %p66 = por %p64, %p65
      %p68 = scmp.ne.s32.totalorder %s51, %s67
      %p69 = scmp.eq.s32.totalorder %s29, 0
      %p70 = por %p68, %p69
      %s71 = ssub.s32 %s30, %s42
      %s72 = ssub.s32 %s31, %s38
      %s73 = sor.u32 %s71, %s72
      %p74 = scmp.eq.s32.totalorder %s73, 0
      %s76 = sadd.s32 %s75, 1
      %s77 = scalar_select %p74, %s75, %s76
      %p80 = pneg %p74
      %p81 = scmp.eq.s32.totalorder %s23, 1
      %p82 = por %p80, %p81
      %p83 = scmp.ne.s32.totalorder %s75, %s78
      %p84 = scmp.eq.s32.totalorder %s23, 0
      %p85 = por %p83, %p84
      %p86 = scmp.ne.s32.totalorder %s75, %s78
      %p87 = scmp.eq.s32.totalorder %s28, 1
      %p88 = por %p86, %p87
      %p89 = scmp.ne.s32.totalorder %s78, %s79
      %p90 = scmp.eq.s32.totalorder %s28, 0
      %p91 = por %p89, %p90
      %p92 = scmp.ne.s32.totalorder %s78, %s79
      %p93 = scmp.eq.s32.totalorder %s29, 1
      %p94 = por %p92, %p93
      %p96 = scmp.ne.s32.totalorder %s79, %s95
      %p97 = scmp.eq.s32.totalorder %s29, 0
      %p98 = por %p96, %p97
      %s100 = sadd.s32 %s99, 1
      %p103 = scmp.eq.s32.totalorder %s23, 1
      %p104 = scmp.ne.s32.totalorder %s99, %s101
      %p105 = scmp.eq.s32.totalorder %s23, 0
      %p106 = por %p104, %p105
      %p107 = scmp.ne.s32.totalorder %s99, %s101
      %p108 = scmp.eq.s32.totalorder %s28, 1
      %p109 = por %p107, %p108
      %p110 = scmp.ne.s32.totalorder %s101, %s102
      %p111 = scmp.eq.s32.totalorder %s28, 0
      %p112 = por %p110, %p111
      %p113 = scmp.ne.s32.totalorder %s101, %s102
      %p114 = scmp.eq.s32.totalorder %s29, 1
      %p115 = por %p113, %p114
      %p117 = scmp.ne.s32.totalorder %s102, %s116
      %p118 = scmp.eq.s32.totalorder %s29, 0
      %p119 = por %p117, %p118
      %s121 = sadd.s32 %s120, 1
      %p124 = scmp.eq.s32.totalorder %s23, 1
      %p125 = scmp.ne.s32.totalorder %s120, %s122
      %p126 = scmp.eq.s32.totalorder %s23, 0
      %p127 = por %p125, %p126
      %p128 = scmp.ne.s32.totalorder %s120, %s122
      %p129 = scmp.eq.s32.totalorder %s28, 1
      %p130 = por %p128, %p129
      %p131 = scmp.ne.s32.totalorder %s122, %s123
      %p132 = scmp.eq.s32.totalorder %s28, 0
      %p133 = por %p131, %p132
      %p134 = scmp.ne.s32.totalorder %s122, %s123
      %p135 = scmp.eq.s32.totalorder %s29, 1
      %p136 = por %p134, %p135
      %p138 = scmp.ne.s32.totalorder %s123, %s137
      %p139 = scmp.eq.s32.totalorder %s29, 0
      %p140 = por %p138, %p139
      %s141 = ssub.s32 %s30, %s42
      %s142 = ssub.s32 %s31, %s38
      %s143 = sor.u32 %s141, %s142
      %p144 = scmp.eq.s32.totalorder %s143, 0
      %s146 = sadd.s32 %s145, 1
      %s147 = scalar_select %p144, %s145, %s146
      %p150 = pneg %p144
      %p151 = scmp.eq.s32.totalorder %s23, 1
      %p152 = por %p150, %p151
      %p153 = scmp.ne.s32.totalorder %s145, %s148
      %p154 = scmp.eq.s32.totalorder %s23, 0
      %p155 = por %p153, %p154
      %p156 = scmp.ne.s32.totalorder %s145, %s148
      %p157 = scmp.eq.s32.totalorder %s28, 1
      %p158 = por %p156, %p157
      %p159 = scmp.ne.s32.totalorder %s148, %s149
      %p160 = scmp.eq.s32.totalorder %s28, 0
      %p161 = por %p159, %p160
      %p162 = scmp.ne.s32.totalorder %s148, %s149
      %p163 = scmp.eq.s32.totalorder %s29, 1
      %p164 = por %p162, %p163
      %p166 = scmp.ne.s32.totalorder %s149, %s165
      %p167 = scmp.eq.s32.totalorder %s29, 0
      %p168 = por %p166, %p167
      %s169 = ssub.s32 %s30, %s42
      %s170 = ssub.s32 %s31, %s38
      %s171 = sor.u32 %s169, %s170
      %p172 = scmp.eq.s32.totalorder %s171, 0
      %s174 = sadd.s32 %s173, 1
      %s175 = scalar_select %p172, %s173, %s174
      %p178 = pneg %p172
      %p179 = scmp.eq.s32.totalorder %s23, 1
      %p180 = por %p178, %p179
      %p181 = scmp.ne.s32.totalorder %s173, %s176
      %p182 = scmp.eq.s32.totalorder %s23, 0
      %p183 = por %p181, %p182
      %p184 = scmp.ne.s32.totalorder %s173, %s176
      %p185 = scmp.eq.s32.totalorder %s28, 1
      %p186 = por %p184, %p185
      %p187 = scmp.ne.s32.totalorder %s176, %s177
      %p188 = scmp.eq.s32.totalorder %s28, 0
      %p189 = por %p187, %p188
      %p190 = scmp.ne.s32.totalorder %s176, %s177
      %p191 = scmp.eq.s32.totalorder %s29, 1
      %p192 = por %p190, %p191
      %p194 = scmp.ne.s32.totalorder %s177, %s193
      %p195 = scmp.eq.s32.totalorder %s29, 0
      %p196 = por %p194, %p195
      %s197 = ssub.s32 %s30, %s42
      %s198 = ssub.s32 %s31, %s38
      %s199 = sor.u32 %s197, %s198
      %p200 = scmp.eq.s32.totalorder %s199, 0
      %s202 = sadd.s32 %s201, 1
      %s203 = scalar_select %p200, %s201, %s202
      %p206 = pneg %p200
      %p207 = scmp.eq.s32.totalorder %s23, 1
      %p208 = por %p206, %p207
      %p209 = scmp.ne.s32.totalorder %s201, %s204
      %p210 = scmp.eq.s32.totalorder %s23, 0
      %p211 = por %p209, %p210
      %p212 = scmp.ne.s32.totalorder %s201, %s204
      %p213 = scmp.eq.s32.totalorder %s28, 1
      %p214 = por %p212, %p213
      %p215 = scmp.ne.s32.totalorder %s204, %s205
      %p216 = scmp.eq.s32.totalorder %s28, 0
      %p217 = por %p215, %p216
      %p218 = scmp.ne.s32.totalorder %s204, %s205
      %p219 = scmp.eq.s32.totalorder %s29, 1
      %p220 = por %p218, %p219
      %p222 = scmp.ne.s32.totalorder %s205, %s221
      %p223 = scmp.eq.s32.totalorder %s29, 0
      %p224 = por %p222, %p223
      %s225 = ssub.s32 %s30, %s42
      %s226 = ssub.s32 %s31, %s38
      %s227 = sor.u32 %s225, %s226
      %p228 = scmp.eq.s32.totalorder %s227, 0
      %s230 = sadd.s32 %s229, 1
      %s231 = scalar_select %p228, %s229, %s230
      %p234 = pneg %p228
      %p235 = scmp.eq.s32.totalorder %s23, 1
      %p236 = por %p234, %p235
      %p237 = scmp.ne.s32.totalorder %s229, %s232
      %p238 = scmp.eq.s32.totalorder %s23, 0
      %p239 = por %p237, %p238
      %p240 = scmp.ne.s32.totalorder %s229, %s232
      %p241 = scmp.eq.s32.totalorder %s28, 1
      %p242 = por %p240, %p241
      %p243 = scmp.ne.s32.totalorder %s232, %s233
      %p244 = scmp.eq.s32.totalorder %s28, 0
      %p245 = por %p243, %p244
      %p246 = scmp.ne.s32.totalorder %s232, %s233
      %p247 = scmp.eq.s32.totalorder %s29, 1
      %p248 = por %p246, %p247
      %p250 = scmp.ne.s32.totalorder %s233, %s249
      %p251 = scmp.eq.s32.totalorder %s29, 0
      %p252 = por %p250, %p251
      %p253 = scmp.le.s32.totalorder 1, %s23
      %p254 = scmp.lt.s32.totalorder %s23, 3
      %p255 = pnand %p253, %p254
      %p256 = pneg %p255
      // Predicated region
      $region9: #{attentive_pooling.1} parent=5 // pred_check
        _
      $region10: #{attentive_pooling.1} parent=5 // pred_check_branch
        %258 = sbr.rel (%p255) target = $region12
      $region11: #{attentive_pooling.1} parent=5 // pred_region
        %s259 = ssub.s32 %s23, 1
        // Predicated region
        $region13: #{attentive_pooling.1} parent=11 // pred_check
          %p260 = pneg %p112
        $region14: #{attentive_pooling.1} parent=11 // pred_check_branch
          %262 = sbr.rel (%p260) target = $region16
        $region15: #{attentive_pooling.1} parent=11 // pred_region
          _
        $region16: #{attentive_pooling.1} parent=11 // pred_fallthru
          _
        // Predicated region
        $region17: #{attentive_pooling.1} parent=11 // pred_check
          %p263 = pneg %p133
        $region18: #{attentive_pooling.1} parent=11 // pred_check_branch
          %265 = sbr.rel (%p263) target = $region20
        $region19: #{attentive_pooling.1} parent=11 // pred_region
          _
        $region20: #{attentive_pooling.1} parent=11 // pred_fallthru
          _
      $region12: #{attentive_pooling.1} parent=5 // pred_fallthru
        _
      %p266 = scmp.lt.s32.totalorder %s23, 2
      // Predicated region
      $region21: #{attentive_pooling.1} parent=5 // pred_check
        %p267 = pneg %p266
      $region22: #{attentive_pooling.1} parent=5 // pred_check_branch
        %269 = sbr.rel (%p267) target = $region24
      $region23: #{attentive_pooling.1} parent=5 // pred_region
        // Predicated region
        $region25: #{attentive_pooling.1} parent=23 // pred_check
          %p270 = pneg %p57
        $region26: #{attentive_pooling.1} parent=23 // pred_check_branch
          %272 = sbr.rel (%p270) target = $region28
        $region27: #{attentive_pooling.1} parent=23 // pred_region
          %p273 = scmp.lt.s32.totalorder %s30, 1
          %s274 = scalar_select %p273, %s30, 1
          %p275 = scmp.lt.s32.totalorder %s31, 0
          %s276 = scalar_select %p275, %s31, 0
          %s277 = sadd.s32 %s276, %s274
          %s278 = smul.addr %s277, 8
          %s279 = scalar_lea.vmem %s0, %s278
        $region28: #{attentive_pooling.1} parent=23 // pred_fallthru
          _
        // Predicated region
        $region29: #{attentive_pooling.1} parent=23 // pred_check
          %p280 = pneg %p85
        $region30: #{attentive_pooling.1} parent=23 // pred_check_branch
          %282 = sbr.rel (%p280) target = $region32
        $region31: #{attentive_pooling.1} parent=23 // pred_region
          %p283 = scmp.lt.s32.totalorder %s30, 1
          %s284 = scalar_select %p283, %s30, 1
          %p285 = scmp.lt.s32.totalorder %s31, 0
          %s286 = scalar_select %p285, %s31, 0
          %s287 = smul.addr %s286, 2
          %s288 = smul.addr %s284, 2
          %s289 = sadd.s32 %s287, %s288
          %s290 = smul.addr %s289, 8
          %s291 = scalar_lea.vmem %s1, %s290
        $region32: #{attentive_pooling.1} parent=23 // pred_fallthru
          _
      $region24: #{attentive_pooling.1} parent=5 // pred_fallthru
        _
      %p292 = scmp.le.s32.totalorder 1, %s23
      %p293 = scmp.lt.s32.totalorder %s23, 3
      %p294 = pnand %p292, %p293
      %p295 = pneg %p294
      // Predicated region
      $region33: #{attentive_pooling.1} parent=5 // pred_check
        _
      $region34: #{attentive_pooling.1} parent=5 // pred_check_branch
        %297 = sbr.rel (%p294) target = $region36
      $region35: #{attentive_pooling.1} parent=5 // pred_region
        %s298 = ssub.s32 %s23, 1
        %p299 = scmp.lt.s32.totalorder %s32, 1
        %s300 = scalar_select %p299, %s32, 1
        %p301 = scmp.lt.s32.totalorder %s33, 0
        %s302 = scalar_select %p301, %s33, 0
        %s303 = sadd.s32 %s302, %s300
        %s304 = smul.addr %s303, 8
        %s305 = scalar_lea.vmem %s0, %s304
        %p306 = pneg %p63
        %p307 = pneg %p60
        %p308 = scmp.lt.s32.totalorder %s32, 1
        %s309 = scalar_select %p308, %s32, 1
        %p310 = scmp.lt.s32.totalorder %s33, 0
        %s311 = scalar_select %p310, %s33, 0
        %s312 = smul.addr %s311, 2
        %s313 = smul.addr %s309, 2
        %s314 = sadd.s32 %s312, %s313
        %s315 = smul.addr %s314, 8
        %s316 = scalar_lea.vmem %s1, %s315
        %p317 = pneg %p91
        %p318 = pneg %p88
        %p319 = pneg %p112
        %p320 = pneg %p109
        %p321 = pneg %p133
        %p322 = pneg %p130
        %p323 = pneg %p161
        %p324 = pneg %p158
        %s325 = sand.u32 %s148, 1
        %s326 = scalar_lea.sflag [#allocation3], %s325
        %s327 = sand.u32 %s148, 1
        %s328 = smul.addr %s327, 8
        %s329 = scalar_lea.vmem [#allocation2], %s328
        %p330 = pneg %p189
        %p331 = pneg %p186
        %s332 = sand.u32 %s28, 1
        %s333 = scalar_lea.sflag [#allocation5], %s332
        %s334 = sand.u32 %s176, 1
        %s335 = smul.addr %s334, 8
        %s336 = scalar_lea.vmem [#allocation4], %s335
        %p337 = pneg %p217
        %p338 = pneg %p214
        %s339 = sand.u32 %s28, 1
        %s340 = scalar_lea.sflag [#allocation5], %s339
        %s341 = sand.u32 %s204, 1
        %s342 = smul.addr %s341, 16
        %s343 = scalar_lea.vmem [#allocation6], %s342
        %p344 = pneg %p245
        %p345 = pneg %p242
        %s346 = sand.u32 %s232, 1
        %s347 = scalar_lea.sflag [#allocation8], %s346
        %s348 = sand.u32 %s232, 1
        %s349 = smul.addr %s348, 16
        %s350 = scalar_lea.vmem [#allocation7], %s349
        %p351 = scmp.lt.s32.totalorder %s32, 1
        %s352 = scalar_select %p351, %s32, 1
        %p353 = scmp.lt.s32.totalorder %s33, 0
        %s354 = scalar_select %p353, %s33, 0
        %s355 = sadd.s32 %s354, %s352
        %s356 = smul.addr %s355, 8
        %s357 = scalar_lea.vmem %s0, %s356
        %p358 = scmp.lt.s32.totalorder %s32, 1
        %s359 = scalar_select %p358, %s32, 1
        %p360 = scmp.lt.s32.totalorder %s33, 0
        %s361 = scalar_select %p360, %s33, 0
        %s362 = smul.addr %s361, 2
        %s363 = smul.addr %s359, 2
        %s364 = sadd.s32 %s362, %s363
        %s365 = smul.addr %s364, 8
        %s366 = scalar_lea.vmem %s1, %s365
        %v367 = vld [vmem:[%s357] sm:$0xff]
        %v368 = vld [vmem:[%s366] sm:$0xff]
        %v369 = vld [vmem:[%s366 + $0x8] sm:$0xff]
        %v370 = vld [vmem:[%s2] sm:$0xff]
        %v371 = vld [vmem:[%s2 + $0x8] sm:$0xff]
        %v372 = vld [vmem:[%s2 + $0x10] sm:$0xff]
        %v373 = vld [vmem:[%s2 + $0x18] sm:$0xff]
        %v374 = vld [vmem:[%s2 + $0x20] sm:$0xff]
        %v375 = vld [vmem:[%s2 + $0x28] sm:$0xff]
        %v376 = vld [vmem:[%s2 + $0x30] sm:$0xff]
        %v377 = vld [vmem:[%s2 + $0x38] sm:$0xff]
        %v378 = vld [vmem:[%s2 + $0x40] sm:$0xff]
        %v379 = vld [vmem:[%s2 + $0x48] sm:$0xff]
        %v380 = vld [vmem:[%s2 + $0x50] sm:$0xff]
        %v381 = vld [vmem:[%s2 + $0x58] sm:$0xff]
        %v382 = vld [vmem:[%s2 + $0x60] sm:$0xff]
        %v383 = vld [vmem:[%s2 + $0x68] sm:$0xff]
        %v384 = vld [vmem:[%s2 + $0x70] sm:$0xff]
        %v385 = vld [vmem:[%s2 + $0x78] sm:$0xff]
        %v386 = vld [vmem:[%s2 + $0x80] sm:$0xff]
        %v387 = vld [vmem:[%s2 + $0x88] sm:$0xff]
        %v388 = vld [vmem:[%s2 + $0x90] sm:$0xff]
        %v389 = vld [vmem:[%s2 + $0x98] sm:$0xff]
        %v390 = vld [vmem:[%s2 + $0xa0] sm:$0xff]
        %v391 = vld [vmem:[%s2 + $0xa8] sm:$0xff]
        %v392 = vld [vmem:[%s2 + $0xb0] sm:$0xff]
        %v393 = vld [vmem:[%s2 + $0xb8] sm:$0xff]
        %v394 = vld [vmem:[%s2 + $0xc0] sm:$0xff]
        %v395 = vld [vmem:[%s2 + $0xc8] sm:$0xff]
        %v396 = vld [vmem:[%s2 + $0xd0] sm:$0xff]
        %v397 = vld [vmem:[%s2 + $0xd8] sm:$0xff]
        %v398 = vld [vmem:[%s2 + $0xe0] sm:$0xff]
        %v399 = vld [vmem:[%s2 + $0xe8] sm:$0xff]
        %v400 = vld [vmem:[%s2 + $0xf0] sm:$0xff]
        %v401 = vld [vmem:[%s2 + $0xf8] sm:$0xff]
        %v402 = vld [vmem:[%s3] sm:$0xff]
        %v403 = vld [vmem:[%s3 + $0x8] sm:$0xff]
        %v404 = vld [vmem:[%s3 + $0x10] sm:$0xff]
        %v405 = vld [vmem:[%s3 + $0x18] sm:$0xff]
        %v406 = vld [vmem:[%s3 + $0x20] sm:$0xff]
        %v407 = vld [vmem:[%s3 + $0x28] sm:$0xff]
        %v408 = vld [vmem:[%s3 + $0x30] sm:$0xff]
        %v409 = vld [vmem:[%s3 + $0x38] sm:$0xff]
        %v410 = vld [vmem:[%s3 + $0x40] sm:$0xff]
        %v411 = vld [vmem:[%s3 + $0x48] sm:$0xff]
        %v412 = vld [vmem:[%s3 + $0x50] sm:$0xff]
        %v413 = vld [vmem:[%s3 + $0x58] sm:$0xff]
        %v414 = vld [vmem:[%s3 + $0x60] sm:$0xff]
        %v415 = vld [vmem:[%s3 + $0x68] sm:$0xff]
        %v416 = vld [vmem:[%s3 + $0x70] sm:$0xff]
        %v417 = vld [vmem:[%s3 + $0x78] sm:$0xff]
        %v418 = vld [vmem:[%s3 + $0x80] sm:$0xff]
        %v419 = vld [vmem:[%s3 + $0x88] sm:$0xff]
        %v420 = vld [vmem:[%s3 + $0x90] sm:$0xff]
        %v421 = vld [vmem:[%s3 + $0x98] sm:$0xff]
        %v422 = vld [vmem:[%s3 + $0xa0] sm:$0xff]
        %v423 = vld [vmem:[%s3 + $0xa8] sm:$0xff]
        %v424 = vld [vmem:[%s3 + $0xb0] sm:$0xff]
        %v425 = vld [vmem:[%s3 + $0xb8] sm:$0xff]
        %v426 = vld [vmem:[%s3 + $0xc0] sm:$0xff]
        %v427 = vld [vmem:[%s3 + $0xc8] sm:$0xff]
        %v428 = vld [vmem:[%s3 + $0xd0] sm:$0xff]
        %v429 = vld [vmem:[%s3 + $0xd8] sm:$0xff]
        %v430 = vld [vmem:[%s3 + $0xe0] sm:$0xff]
        %v431 = vld [vmem:[%s3 + $0xe8] sm:$0xff]
        %v432 = vld [vmem:[%s3 + $0xf0] sm:$0xff]
        %v433 = vld [vmem:[%s3 + $0xf8] sm:$0xff]
        %434 = vmatprep.subr.mxu0 0.0
        %435 = vmatpush1.msra.mxu0 %v402
        %436 = vmatprep.subr.mxu0 0.0
        %437 = vmatpush1.msra.mxu0 %v403
        %438 = vmatprep.subr.mxu0 0.0
        %439 = vmatpush1.msra.mxu0 %v404
        %440 = vmatprep.subr.mxu0 0.0
        %441 = vmatpush1.msra.mxu0 %v405
        %442 = vmatprep.subr.mxu0 0.0
        %443 = vmatpush1.msra.mxu0 %v406
        %444 = vmatprep.subr.mxu0 0.0
        %445 = vmatpush1.msra.mxu0 %v407
        %446 = vmatprep.subr.mxu0 0.0
        %447 = vmatpush1.msra.mxu0 %v408
        %448 = vmatprep.subr.mxu0 0.0
        %449 = vmatpush1.msra.mxu0 %v409
        %450 = vmatprep.subr.mxu0 0.0
        %451 = vmatpush1.msra.mxu0 %v410
        %452 = vmatprep.subr.mxu0 0.0
        %453 = vmatpush1.msra.mxu0 %v411
        %454 = vmatprep.subr.mxu0 0.0
        %455 = vmatpush1.msra.mxu0 %v412
        %456 = vmatprep.subr.mxu0 0.0
        %457 = vmatpush1.msra.mxu0 %v413
        %458 = vmatprep.subr.mxu0 0.0
        %459 = vmatpush1.msra.mxu0 %v414
        %460 = vmatprep.subr.mxu0 0.0
        %461 = vmatpush1.msra.mxu0 %v415
        %462 = vmatprep.subr.mxu0 0.0
        %463 = vmatpush1.msra.mxu0 %v416
        %464 = vmatprep.subr.mxu0 0.0
        %465 = vmatpush1.msra.mxu0 %v417
        %466 = vmatprep.subr.mxu0 0.0
        %467 = vmatpush1.msra.mxu0 %v418
        %468 = vmatprep.subr.mxu0 0.0
        %469 = vmatpush1.msra.mxu0 %v419
        %470 = vmatprep.subr.mxu0 0.0
        %471 = vmatpush1.msra.mxu0 %v420
        %472 = vmatprep.subr.mxu0 0.0
        %473 = vmatpush1.msra.mxu0 %v421
        %474 = vmatprep.subr.mxu0 0.0
        %475 = vmatpush1.msra.mxu0 %v422
        %476 = vmatprep.subr.mxu0 0.0
        %477 = vmatpush1.msra.mxu0 %v423
        %478 = vmatprep.subr.mxu0 0.0
        %479 = vmatpush1.msra.mxu0 %v424
        %480 = vmatprep.subr.mxu0 0.0
        %481 = vmatpush1.msra.mxu0 %v425
        %482 = vmatprep.subr.mxu0 0.0
        %483 = vmatpush1.msra.mxu0 %v426
        %484 = vmatprep.subr.mxu0 0.0
        %485 = vmatpush1.msra.mxu0 %v427
        %486 = vmatprep.subr.mxu0 0.0
        %487 = vmatpush1.msra.mxu0 %v428
        %488 = vmatprep.subr.mxu0 0.0
        %489 = vmatpush1.msra.mxu0 %v429
        %490 = vmatprep.subr.mxu0 0.0
        %491 = vmatpush1.msra.mxu0 %v430
        %492 = vmatprep.subr.mxu0 0.0
        %493 = vmatpush1.msra.mxu0 %v431
        %494 = vmatprep.subr.mxu0 0.0
        %495 = vmatpush1.msra.mxu0 %v432
        %496 = vmatprep.subr.mxu0 0.0
        %497 = vmatpush1.msra.mxu0 %v433
        %498 = vmatprep.mubr.f32.mxu0 %v369
        %499 = vmatmul.mubr.f32.gmra.mrb[0].mxu0 %v368
        %v500 = vpop.f32.mrb[0].mxu0
        %v501 = vadd.f32 0.0, %v500
        %v502 = vpop.f32.mrb[0].mxu0
        %503 = vdwg.mxu0
        %v504 = vtanh.pop %v501
        %505 = vmatprep.subr.mxu0 %v371
        %506 = vmatpush1.msra.mxu0 %v370
        %507 = vmatprep.subr.mxu0 %v373
        %508 = vmatpush1.msra.mxu0 %v372
        %509 = vmatprep.subr.mxu0 %v375
        %510 = vmatpush1.msra.mxu0 %v374
        %511 = vmatprep.subr.mxu0 %v377
        %512 = vmatpush1.msra.mxu0 %v376
        %513 = vmatprep.subr.mxu0 %v379
        %514 = vmatpush1.msra.mxu0 %v378
        %515 = vmatprep.subr.mxu0 %v381
        %516 = vmatpush1.msra.mxu0 %v380
        %517 = vmatprep.subr.mxu0 %v383
        %518 = vmatpush1.msra.mxu0 %v382
        %519 = vmatprep.subr.mxu0 %v385
        %520 = vmatpush1.msra.mxu0 %v384
        %521 = vmatprep.subr.mxu0 %v387
        %522 = vmatpush1.msra.mxu0 %v386
        %523 = vmatprep.subr.mxu0 %v389
        %524 = vmatpush1.msra.mxu0 %v388
        %525 = vmatprep.subr.mxu0 %v391
        %526 = vmatpush1.msra.mxu0 %v390
        %527 = vmatprep.subr.mxu0 %v393
        %528 = vmatpush1.msra.mxu0 %v392
        %529 = vmatprep.subr.mxu0 %v395
        %530 = vmatpush1.msra.mxu0 %v394
        %531 = vmatprep.subr.mxu0 %v397
        %532 = vmatpush1.msra.mxu0 %v396
        %533 = vmatprep.subr.mxu0 %v399
        %534 = vmatpush1.msra.mxu0 %v398
        %535 = vmatprep.subr.mxu0 %v401
        %536 = vmatpush1.msra.mxu0 %v400
        %537 = vmatprep.subr.mxu0 0.0
        %538 = vmatpush1.msra.mxu0 0.0
        %539 = vmatprep.subr.mxu0 0.0
        %540 = vmatpush1.msra.mxu0 0.0
        %541 = vmatprep.subr.mxu0 0.0
        %542 = vmatpush1.msra.mxu0 0.0
        %543 = vmatprep.subr.mxu0 0.0
        %544 = vmatpush1.msra.mxu0 0.0
        %545 = vmatprep.subr.mxu0 0.0
        %546 = vmatpush1.msra.mxu0 0.0
        %547 = vmatprep.subr.mxu0 0.0
        %548 = vmatpush1.msra.mxu0 0.0
        %549 = vmatprep.subr.mxu0 0.0
        %550 = vmatpush1.msra.mxu0 0.0
        %551 = vmatprep.subr.mxu0 0.0
        %552 = vmatpush1.msra.mxu0 0.0
        %553 = vmatprep.subr.mxu0 0.0
        %554 = vmatpush1.msra.mxu0 0.0
        %555 = vmatprep.subr.mxu0 0.0
        %556 = vmatpush1.msra.mxu0 0.0
        %557 = vmatprep.subr.mxu0 0.0
        %558 = vmatpush1.msra.mxu0 0.0
        %559 = vmatprep.subr.mxu0 0.0
        %560 = vmatpush1.msra.mxu0 0.0
        %561 = vmatprep.subr.mxu0 0.0
        %562 = vmatpush1.msra.mxu0 0.0
        %563 = vmatprep.subr.mxu0 0.0
        %564 = vmatpush1.msra.mxu0 0.0
        %565 = vmatprep.subr.mxu0 0.0
        %566 = vmatpush1.msra.mxu0 0.0
        %567 = vmatprep.subr.mxu0 0.0
        %568 = vmatpush1.msra.mxu0 0.0
        %569 = vmatprep.mubr.f32.mxu0 0.0
        %570 = vmatmul.mubr.f32.gmra.mrb[0].mxu0 %v367
        %v571 = vpop.f32.mrb[0].mxu0
        %v572 = vadd.f32 0.0, %v571
        %v573 = vpop.f32.mrb[0].mxu0
        %v574 = vadd.f32 0.0, %v573
        %575 = vdwg.mxu0
        %v576 = vtanh.pop %v572
        %v577 = vtanh.pop %v574
        %578 = vmax.xlane.f32.xlu0 %v504
        %v579 = vpop.xlane.xlu0 %578
        %v580 = vsub.f32 %v504, %v579
        %v581 = vmul.f32 %v580, 1.442695
        %v582 = vpow.pop %v581
        %583 = vadd.xlane.f32.xlu0 %v582
        %v584 = vpop.xlane.xlu0 %583
        %v585 = vrcp.pop %v584
        %v586 = vmul.f32 %v582, %v585
        %v587 = vmax.f32 %v576, %v577
        %588 = vmax.xlane.f32.xlu0 %v587
        %v589 = vpop.xlane.xlu0 %588
        %v590 = vsub.f32 %v576, %v589
        %v591 = vsub.f32 %v577, %v589
        %v592 = vmul.f32 %v590, 1.442695
        %v593 = vpow.pop %v592
        %v594 = vmul.f32 %v591, 1.442695
        %v595 = vpow.pop %v594
        %v596 = vadd.f32 %v593, %v595
        %597 = vadd.xlane.f32.xlu0 %v596
        %v598 = vpop.xlane.xlu0 %597
        %v599 = vrcp.pop %v598
        %v600 = vmul.f32 %v593, %v599
        %v601 = vmul.f32 %v595, %v599
        %602 = vst [vmem:[%s336] sm:$0xff] %v586
        %603 = vst [vmem:[%s350] sm:$0xff] %v600
        %604 = vst [vmem:[%s350 + $0x8] sm:$0xff] %v601
        %v605 = vmul.f32 %v367, %v586
        %606 = vst [vmem:[%s329] sm:$0xff] %v605
        %v607 = vmul.f32 %v368, %v600
        %v608 = vmul.f32 %v369, %v601
        %609 = vst [vmem:[%s343] sm:$0xff] %v607
        %610 = vst [vmem:[%s343 + $0x8] sm:$0xff] %v608
        %s611 = sand.u32 %s148, 1
        %s612 = scalar_lea.sflag [#allocation3], %s611
        %s613 = sand.u32 %s148, 1
        %s614 = smul.addr %s613, 8
        %s615 = scalar_lea.vmem [#allocation2], %s614
        %s616 = sand.u32 %s28, 1
        %s617 = scalar_lea.sflag [#allocation5], %s616
        %s618 = sand.u32 %s176, 1
        %s619 = smul.addr %s618, 8
        %s620 = scalar_lea.vmem [#allocation4], %s619
        %s621 = sand.u32 %s28, 1
        %s622 = scalar_lea.sflag [#allocation5], %s621
        %s623 = sand.u32 %s204, 1
        %s624 = smul.addr %s623, 16
        %s625 = scalar_lea.vmem [#allocation6], %s624
        %s626 = sand.u32 %s232, 1
        %s627 = scalar_lea.sflag [#allocation8], %s626
        %s628 = sand.u32 %s232, 1
        %s629 = smul.addr %s628, 16
        %s630 = scalar_lea.vmem [#allocation7], %s629
        // Predicated region
        $region37: #{attentive_pooling.1} parent=35 // pred_check
          %p631 = pneg %p158
        $region38: #{attentive_pooling.1} parent=35 // pred_check_branch
          %633 = sbr.rel (%p631) target = $region40
        $region39: #{attentive_pooling.1} parent=35 // pred_region
          %s635 = ssub.s32 128, 128
          %636 = vsyncadd %s612, %s635
          %s637 = sadd.s32 %s33, %s32
          %s638 = smul.addr %s637, 128
          %s639 = scalar_lea.hbm %s4, %s638
          %s641 = sshll.u32 %s615, 4
          %s642 = int_to_ptr.vmem [resolvable:$true] %s641
          %644 = dma.vmem_to_hbm [thread:$0]  %s642, 128, %s639, %s612
        $region40: #{attentive_pooling.1} parent=35 // pred_fallthru
          _
        // Predicated region
        $region41: #{attentive_pooling.1} parent=35 // pred_check
          %p645 = pneg %p186
        $region42: #{attentive_pooling.1} parent=35 // pred_check_branch
          %647 = sbr.rel (%p645) target = $region44
        $region43: #{attentive_pooling.1} parent=35 // pred_region
          %s649 = ssub.s32 128, 128
          %650 = vsyncadd %s617, %s649
          %s651 = sadd.s32 %s33, %s32
          %s652 = smul.addr %s651, 128
          %s653 = scalar_lea.hbm %s5, %s652
          %s655 = sshll.u32 %s620, 4
          %s656 = int_to_ptr.vmem [resolvable:$true] %s655
          %658 = dma.vmem_to_hbm [thread:$0]  %s656, 128, %s653, %s617
        $region44: #{attentive_pooling.1} parent=35 // pred_fallthru
          _
        // Predicated region
        $region45: #{attentive_pooling.1} parent=35 // pred_check
          %p659 = pneg %p214
        $region46: #{attentive_pooling.1} parent=35 // pred_check_branch
          %661 = sbr.rel (%p659) target = $region48
        $region47: #{attentive_pooling.1} parent=35 // pred_region
          %s663 = ssub.s32 256, 256
          %664 = vsyncadd %s622, %s663
          %s665 = smul.addr %s33, 2
          %s666 = smul.addr %s32, 2
          %s667 = sadd.s32 %s665, %s666
          %s668 = smul.addr %s667, 128
          %s669 = scalar_lea.hbm %s6, %s668
          %s671 = sshll.u32 %s625, 4
          %s672 = int_to_ptr.vmem [resolvable:$true] %s671
          %674 = dma.vmem_to_hbm [thread:$0]  %s672, 256, %s669, %s622
        $region48: #{attentive_pooling.1} parent=35 // pred_fallthru
          _
        // Predicated region
        $region49: #{attentive_pooling.1} parent=35 // pred_check
          %p675 = pneg %p242
        $region50: #{attentive_pooling.1} parent=35 // pred_check_branch
          %677 = sbr.rel (%p675) target = $region52
        $region51: #{attentive_pooling.1} parent=35 // pred_region
          %s679 = ssub.s32 256, 256
          %680 = vsyncadd %s627, %s679
          %s681 = smul.addr %s33, 2
          %s682 = smul.addr %s32, 2
          %s683 = sadd.s32 %s681, %s682
          %s684 = smul.addr %s683, 128
          %s685 = scalar_lea.hbm %s7, %s684
          %s687 = sshll.u32 %s630, 4
          %s688 = int_to_ptr.vmem [resolvable:$true] %s687
          %690 = dma.vmem_to_hbm [thread:$0]  %s688, 256, %s685, %s627
        $region52: #{attentive_pooling.1} parent=35 // pred_fallthru
          _
      $region36: #{attentive_pooling.1} parent=5 // pred_fallthru
        _
      %p691 = scmp.le.s32.totalorder 2, %s23
      // Predicated region
      $region53: #{attentive_pooling.1} parent=5 // pred_check
        %p692 = pneg %p691
      $region54: #{attentive_pooling.1} parent=5 // pred_check_branch
        %694 = sbr.rel (%p692) target = $region56
      $region55: #{attentive_pooling.1} parent=5 // pred_region
        %s695 = ssub.s32 %s23, 2
        // Predicated region
        $region57: #{attentive_pooling.1} parent=55 // pred_check
          %p696 = pneg %p164
        $region58: #{attentive_pooling.1} parent=55 // pred_check_branch
          %698 = sbr.rel (%p696) target = $region60
        $region59: #{attentive_pooling.1} parent=55 // pred_region
          %s699 = sand.u32 %s149, 1
          %s700 = scalar_lea.sflag [#allocation3], %s699
          %s701 = sand.u32 %s149, 1
          %s702 = smul.addr %s701, 8
          %s703 = scalar_lea.vmem [#allocation2], %s702
          %704 = dma.done %s700, 128
        $region60: #{attentive_pooling.1} parent=55 // pred_fallthru
          _
        // Predicated region
        $region61: #{attentive_pooling.1} parent=55 // pred_check
          %p705 = pneg %p192
        $region62: #{attentive_pooling.1} parent=55 // pred_check_branch
          %707 = sbr.rel (%p705) target = $region64
        $region63: #{attentive_pooling.1} parent=55 // pred_region
          %s708 = sand.u32 %s29, 1
          %s709 = scalar_lea.sflag [#allocation5], %s708
          %s710 = sand.u32 %s177, 1
          %s711 = smul.addr %s710, 8
          %s712 = scalar_lea.vmem [#allocation4], %s711
          %713 = dma.done %s709, 128
        $region64: #{attentive_pooling.1} parent=55 // pred_fallthru
          _
        // Predicated region
        $region65: #{attentive_pooling.1} parent=55 // pred_check
          %p714 = pneg %p220
        $region66: #{attentive_pooling.1} parent=55 // pred_check_branch
          %716 = sbr.rel (%p714) target = $region68
        $region67: #{attentive_pooling.1} parent=55 // pred_region
          %s717 = sand.u32 %s29, 1
          %s718 = scalar_lea.sflag [#allocation5], %s717
          %s719 = sand.u32 %s205, 1
          %s720 = smul.addr %s719, 16
          %s721 = scalar_lea.vmem [#allocation6], %s720
          %722 = dma.done %s718, 256
        $region68: #{attentive_pooling.1} parent=55 // pred_fallthru
          _
        // Predicated region
        $region69: #{attentive_pooling.1} parent=55 // pred_check
          %p723 = pneg %p248
        $region70: #{attentive_pooling.1} parent=55 // pred_check_branch
          %725 = sbr.rel (%p723) target = $region72
        $region71: #{attentive_pooling.1} parent=55 // pred_region
          %s726 = sand.u32 %s233, 1
          %s727 = scalar_lea.sflag [#allocation8], %s726
          %s728 = sand.u32 %s233, 1
          %s729 = smul.addr %s728, 16
          %s730 = scalar_lea.vmem [#allocation7], %s729
          %731 = dma.done %s727, 256
        $region72: #{attentive_pooling.1} parent=55 // pred_fallthru
          _
      $region56: #{attentive_pooling.1} parent=5 // pred_fallthru
        _
    $region6: #{attentive_pooling.1} parent=1 // loop_footer
      %s27 = sadd.s32 1, %s23
    $region7: #{attentive_pooling.1} parent=1 // loop_footer_branch
      %22 = sbr.rel target = $region3
    $region8: #{attentive_pooling.1} parent=1 // loop_exit
      _
    %732 = vsyncpa [#allocation3], 1
    %s733 = scalar_lea.sflag [#allocation3], 1
    %734 = vsyncpa %s733, 1
    %735 = vsyncpa [#allocation5], 1
    %s736 = scalar_lea.sflag [#allocation5], 1
    %737 = vsyncpa %s736, 1
    %738 = vsyncpa [#allocation8], 1
    %s739 = scalar_lea.sflag [#allocation8], 1
    %740 = vsyncpa %s739, 1

</llo_original>
